<compile_context>
chip_gen: v6e
topology: v6e:2x2x1
jax: 0.10.0
libtpu: 0.0.40
codegen_flags: <defaults>
</compile_context>

<pallas_src>
import functools

import jax
import jax.numpy as jnp
from jax.experimental import pallas as pl
from jax.experimental.pallas import tpu as pltpu


def _round_up(x, m):
    return ((x + m - 1) // m) * m


def _row_alignment(itemsize):
    # Packed sublane tile: 8 rows for 32-bit, 16 for bf16, 32 for int8/fp8.
    return max(8, 32 // max(1, int(itemsize)))


def _choose_block_rows(n, c, itemsize):
    # Budget on the f32 compute footprint: target ~4 MiB per full-width
    # (rows, C) f32 intermediate (docs: ~85% of HBM roofline at ~512-row
    # tiles; bigger buys <2%). Pallas double-buffers the input tile on top.
    row_align = _row_alignment(itemsize)
    target_f32_bytes = 4 * 1024 * 1024
    rows = max(row_align, target_f32_bytes // max(1, c * 4))
    rows = min(rows, 1024)
    rows = min(rows, _round_up(n, row_align))
    rows = max(row_align, (rows // row_align) * row_align)
    return int(rows)


def _vmem_limit_bytes():
    # Per-generation scoped VMEM budget. Conservative when the query fails.
    try:
        cap = getattr(pltpu.get_tpu_info(), "vmem_capacity_bytes", None)
    except Exception:
        cap = None
    if cap is not None and cap > 64 * 1024 * 1024:
        return 48 * 1024 * 1024   # v5e / v6e: 128 MiB physical
    return 32 * 1024 * 1024       # v7x (64 MiB physical) or unknown


def _nrce_kernel(logits_ref, aux_ref, out_ref, *, a, mid_snr, n_rows):
    """Per-row noise-robust CE for one (block_rows, C) tile.

    Writes per-row losses (invalid / tail rows -> 0.0) to a (block_rows, 1)
    output block. Out-of-bounds tail-tile reads are garbage but are removed by
    the unconditional jnp.where select below.
    """
    i = pl.program_id(0)

    logits = logits_ref[...].astype(jnp.float32)          # (rows, C)
    aux = aux_ref[...]                                     # (rows, 2) f32
    labels_f = aux[:, 0:1]                                 # labels encoded as f32
    snrs = aux[:, 1:2]
    rows, c = logits.shape

    # k = exp(a * (snrs - mid_snr)) — one EUP exp per row.
    k = jnp.exp(a * (snrs - mid_snr))                      # (rows, 1)

    # Numerically stable logsumexp; `logits - m` fuses into the exp.
    m = jnp.max(logits, axis=-1, keepdims=True)            # (rows, 1)
    sumexp = jnp.sum(jnp.exp(logits - m), axis=-1, keepdims=True)
    lse = jnp.log(sumexp)                                  # (rows, 1)

    # "Gather" the label logit from the raw logits via lane-iota compare.
    labels_i = labels_f.astype(jnp.int32)                  # exact for |l| < 2^24
    class_ids = jax.lax.broadcasted_iota(jnp.int32, logits.shape, 1)
    logit_label = jnp.sum(jnp.where(class_ids == labels_i, logits, 0.0),
                          axis=-1, keepdims=True)          # (rows, 1)

    # loss_i = -k * log_softmax[label] = k * (m + lse - logit_label)
    per_row = k * (m + lse - logit_label)                  # (rows, 1)

    # Mask: out-of-range labels (one_hot of invalid == all zeros) and rows past
    # the true batch size in the (possibly partial) tail tile.
    valid = jnp.logical_and(labels_i >= 0, labels_i < c)
    row_ids = i * rows + jax.lax.broadcasted_iota(jnp.int32, per_row.shape, 0)
    keep = jnp.logical_and(valid, row_ids < n_rows)
    out_ref[...] = jnp.where(keep, per_row, 0.0)


def noise_robust_cross_entropy(logits, labels, snrs, *, mid_snr=-2.0, a=0.01,
                               reduction="mean", block_rows=None):
    """JAX/Pallas equivalent of NoiseRobustCrossEntropy.forward."""
    n, c = logits.shape
    itemsize = jnp.dtype(logits.dtype).itemsize
    if block_rows is None:
        block_rows = _choose_block_rows(n, c, itemsize)
    row_align = _row_alignment(itemsize)
    block_rows = max(row_align, (int(block_rows) // row_align) * row_align)

    num_tiles = int(pl.cdiv(n, block_rows))

    # labels + snrs packed into one (N, 2) f32 side input (2 DMA streams, not 3).
    # labels survive the f32 round-trip exactly for any realistic class count.
    aux = jnp.stack([labels.astype(jnp.float32), snrs.astype(jnp.float32)],
                    axis=1)

    kernel = functools.partial(_nrce_kernel, a=float(a), mid_snr=float(mid_snr),
                               n_rows=n)

    # NOTE: logits stay in their native dtype (bf16 halves HBM traffic);
    # the kernel casts to f32 for the math. No wrapper-side padding: the last
    # tile is a partial block whose garbage rows are masked in-kernel.
    per_row = pl.pallas_call(
        kernel,
        out_shape=jax.ShapeDtypeStruct((num_tiles * block_rows, 1),
                                       jnp.float32),
        grid=(num_tiles,),
        in_specs=[
            pl.BlockSpec((block_rows, c), lambda i: (i, 0)),   # logits tile
            pl.BlockSpec((block_rows, 2), lambda i: (i, 0)),   # labels|snrs
        ],
        out_specs=pl.BlockSpec((block_rows, 1), lambda i: (i, 0)),
        compiler_params=pltpu.CompilerParams(
            # Independent row tiles -> megacore-shardable on v7x.
            dimension_semantics=("parallel",),
            vmem_limit_bytes=_vmem_limit_bytes()),
    )(logits, aux)

    if reduction == "mean":
        # Padded rows are exactly 0.0; divide by the true batch size.
        return jnp.sum(per_row) / n
    if reduction == "sum":
        return jnp.sum(per_row)
    # reduction == 'none' (or anything else, matching the PyTorch module).
    return per_row[:n, 0]


def _reference_per_row(logits, labels, snrs, *, mid_snr=-2.0, a=0.01):
    k = jnp.exp(a * (snrs.astype(jnp.float32) - mid_snr)).reshape(-1, 1)
    onehot = jax.nn.one_hot(labels, logits.shape[-1], dtype=jnp.float32)
    p = jax.nn.softmax(logits.astype(jnp.float32), axis=-1)
    return jnp.sum(-k * jnp.log(p) * onehot, axis=1)


if __name__ == "__main__":
    key = jax.random.PRNGKey(0)
    k_logits, k_labels, k_snrs, k2_logits, k2_labels, k2_snrs = (
        jax.random.split(key, 6))

    # ---- Case 1: N=10, C=32; block_rows=8 -> 2-step grid with a partial,
    # masked tail tile (no wrapper padding of logits).
    N, C = 10, 32
    logits = jax.random.normal(k_logits, (N, C), dtype=jnp.float32)
    labels = jax.random.randint(k_labels, (N,), 0, C, dtype=jnp.int32)
    snrs = jax.random.uniform(k_snrs, (N,), minval=-10.0, maxval=10.0,
                              dtype=jnp.float32)

    ref_rows = _reference_per_row(logits, labels, snrs, mid_snr=-2.0, a=0.01)

    loss_mean = jax.block_until_ready(noise_robust_cross_entropy(
        logits, labels, snrs, mid_snr=-2.0, a=0.01, reduction="mean",
        block_rows=8))
    assert jnp.allclose(loss_mean, jnp.mean(ref_rows), rtol=1e-5, atol=1e-5), (
        loss_mean, jnp.mean(ref_rows))

    loss_sum = jax.block_until_ready(noise_robust_cross_entropy(
        logits, labels, snrs, mid_snr=-2.0, a=0.01, reduction="sum",
        block_rows=8))
    assert jnp.allclose(loss_sum, jnp.sum(ref_rows), rtol=1e-5, atol=1e-5), (
        loss_sum, jnp.sum(ref_rows))

    loss_none = jax.block_until_ready(noise_robust_cross_entropy(
        logits, labels, snrs, mid_snr=-2.0, a=0.01, reduction="none",
        block_rows=8))
    assert loss_none.shape == (N,)
    assert jnp.allclose(loss_none, ref_rows, rtol=1e-5, atol=1e-5)

    # ---- Case 2: native bf16 logits (no wrapper cast; f32 math in-kernel);
    # block_rows auto-realigned to the bf16 sublane packing (16).
    logits_bf16 = logits.astype(jnp.bfloat16)
    loss_bf16 = jax.block_until_ready(noise_robust_cross_entropy(
        logits_bf16, labels, snrs, mid_snr=-2.0, a=0.01, reduction="mean",
        block_rows=8))
    ref_bf16 = jnp.mean(_reference_per_row(logits_bf16, labels, snrs,
                                           mid_snr=-2.0, a=0.01))
    assert jnp.allclose(loss_bf16, ref_bf16, rtol=1e-4, atol=1e-4), (
        loss_bf16, ref_bf16)

    # ---- Case 3: N=13 (not a multiple of 8), C=100 (not a multiple of 128),
    # auto block_rows — covers lane-padded reductions + partial tail tile.
    N2, C2 = 13, 100
    logits2 = jax.random.normal(k2_logits, (N2, C2), dtype=jnp.float32)
    labels2 = jax.random.randint(k2_labels, (N2,), 0, C2, dtype=jnp.int32)
    snrs2 = jax.random.uniform(k2_snrs, (N2,), minval=-10.0, maxval=10.0,
                               dtype=jnp.float32)
    ref_rows2 = _reference_per_row(logits2, labels2, snrs2, mid_snr=-2.0,
                                   a=0.01)

    loss2_mean = jax.block_until_ready(noise_robust_cross_entropy(
        logits2, labels2, snrs2, mid_snr=-2.0, a=0.01, reduction="mean"))
    assert jnp.allclose(loss2_mean, jnp.mean(ref_rows2), rtol=1e-5, atol=1e-5), (
        loss2_mean, jnp.mean(ref_rows2))

    loss2_none = jax.block_until_ready(noise_robust_cross_entropy(
        logits2, labels2, snrs2, mid_snr=-2.0, a=0.01, reduction="none"))
    assert loss2_none.shape == (N2,)
    assert jnp.allclose(loss2_none, ref_rows2, rtol=1e-5, atol=1e-5)

    print("KERNEL_OK")
</pallas_src>

<mosaic_0001>
module attributes {stable_mosaic.version = 11 : i64} {
  func.func @_nrce_kernel(%arg0: i32, %arg1: memref<8x32xf32, #tpu.memory_space<vmem>>, %arg2: memref<8x2xf32, #tpu.memory_space<vmem>>, %arg3: memref<8x1xf32, #tpu.memory_space<vmem>>) attributes {dimension_semantics = [#tpu.dimension_semantics<parallel>], iteration_bounds = array<i64: 2>, scalar_prefetch = 0 : i64, scratch_operands = 0 : i64, tpu.core_type = #tpu.core_type<tc>, window_params = [{transform_indices = @transform_0, window_bounds = array<i64: 8, 32>}, {transform_indices = @transform_1, window_bounds = array<i64: 8, 2>}, {transform_indices = @transform_2, window_bounds = array<i64: 8, 1>}]} {
    %c0 = arith.constant 0 : index
    %c0_0 = arith.constant 0 : index
    %0 = vector.load %arg1[%c0, %c0_0] : memref<8x32xf32, #tpu.memory_space<vmem>>, vector<8x32xf32>
    %c0_1 = arith.constant 0 : index
    %c0_2 = arith.constant 0 : index
    %1 = vector.load %arg2[%c0_1, %c0_2] : memref<8x2xf32, #tpu.memory_space<vmem>>, vector<8x2xf32>
    %2 = vector.extract_strided_slice %1 {offsets = [0, 0], sizes = [8, 1], strides = [1, 1]} : vector<8x2xf32> to vector<8x1xf32>
    %3 = vector.extract_strided_slice %1 {offsets = [0, 1], sizes = [8, 1], strides = [1, 1]} : vector<8x2xf32> to vector<8x1xf32>
    %cst = arith.constant -2.000000e+00 : f32
    %4 = vector.broadcast %cst : f32 to vector<8x1xf32>
    %5 = arith.subf %3, %4 : vector<8x1xf32>
    %cst_3 = arith.constant 0.00999999977 : f32
    %6 = vector.broadcast %cst_3 : f32 to vector<8x1xf32>
    %7 = arith.mulf %6, %5 : vector<8x1xf32>
    %8 = math.exp %7 : vector<8x1xf32>
    %cst_4 = arith.constant dense<0xFF800000> : vector<8xf32>
    %9 = vector.multi_reduction <maximumf>, %0, %cst_4 [1] : vector<8x32xf32> to vector<8xf32>
    %10 = vector.shape_cast %9 : vector<8xf32> to vector<8x1xf32>
    %11 = vector.broadcast %10 : vector<8x1xf32> to vector<8x32xf32>
    %12 = arith.subf %0, %11 : vector<8x32xf32>
    %13 = math.exp %12 : vector<8x32xf32>
    %cst_5 = arith.constant dense<0.000000e+00> : vector<8xf32>
    %14 = vector.multi_reduction <add>, %13, %cst_5 [1] : vector<8x32xf32> to vector<8xf32>
    %15 = vector.shape_cast %14 : vector<8xf32> to vector<8x1xf32>
    %16 = math.log %15 : vector<8x1xf32>
    %17 = arith.fptosi %2 : vector<8x1xf32> to vector<8x1xi32>
    %18 = tpu.iota {dimensions = array<i32: 1>} : vector<8x32xi32>
    %19 = vector.broadcast %17 : vector<8x1xi32> to vector<8x32xi32>
    %20 = arith.cmpi eq, %18, %19 : vector<8x32xi32>
    %cst_6 = arith.constant 0.000000e+00 : f32
    %21 = vector.broadcast %cst_6 : f32 to vector<8x32xf32>
    %22 = arith.select %20, %0, %21 : vector<8x32xi1>, vector<8x32xf32>
    %cst_7 = arith.constant dense<0.000000e+00> : vector<8xf32>
    %23 = vector.multi_reduction <add>, %22, %cst_7 [1] : vector<8x32xf32> to vector<8xf32>
    %24 = vector.shape_cast %23 : vector<8xf32> to vector<8x1xf32>
    %25 = arith.addf %10, %16 : vector<8x1xf32>
    %26 = arith.subf %25, %24 : vector<8x1xf32>
    %27 = arith.mulf %8, %26 : vector<8x1xf32>
    %c0_i32 = arith.constant 0 : i32
    %28 = vector.broadcast %c0_i32 : i32 to vector<8x1xi32>
    %29 = arith.cmpi sge, %17, %28 : vector<8x1xi32>
    %c32_i32 = arith.constant 32 : i32
    %30 = vector.broadcast %c32_i32 : i32 to vector<8x1xi32>
    %31 = arith.cmpi slt, %17, %30 : vector<8x1xi32>
    %32 = arith.andi %29, %31 : vector<8x1xi1>
    %c8_i32 = arith.constant 8 : i32
    %33 = arith.muli %arg0, %c8_i32 : i32
    %34 = tpu.iota {dimensions = array<i32: 0>} : vector<8x1xi32>
    %35 = vector.broadcast %33 : i32 to vector<8x1xi32>
    %36 = arith.addi %35, %34 : vector<8x1xi32>
    %c10_i32 = arith.constant 10 : i32
    %37 = vector.broadcast %c10_i32 : i32 to vector<8x1xi32>
    %38 = arith.cmpi slt, %36, %37 : vector<8x1xi32>
    %39 = arith.andi %32, %38 : vector<8x1xi1>
    %cst_8 = arith.constant 0.000000e+00 : f32
    %40 = vector.broadcast %cst_8 : f32 to vector<8x1xf32>
    %41 = arith.select %39, %27, %40 : vector<8x1xi1>, vector<8x1xf32>
    %c0_9 = arith.constant 0 : index
    %c0_10 = arith.constant 0 : index
    %42 = vector.load %arg3[%c0_9, %c0_10] : memref<8x1xf32, #tpu.memory_space<vmem>>, vector<8x1xf32>
    tpu.vector_store %arg3[%c0_9, %c0_10], %41 {strides = array<i32>} : memref<8x1xf32, #tpu.memory_space<vmem>>, vector<8x1xf32>,
    return
  }
  func.func @transform_0(%arg0: i32) -> (i32, i32) {
    %c0_i32 = arith.constant 0 : i32
    %c0_i32_0 = arith.constant 0 : i32
    return %arg0, %c0_i32 : i32, i32
  }
  func.func @transform_1(%arg0: i32) -> (i32, i32) {
    %c0_i32 = arith.constant 0 : i32
    %c0_i32_0 = arith.constant 0 : i32
    return %arg0, %c0_i32 : i32, i32
  }
  func.func @transform_2(%arg0: i32) -> (i32, i32) {
    %c0_i32 = arith.constant 0 : i32
    %c0_i32_0 = arith.constant 0 : i32
    return %arg0, %c0_i32 : i32, i32
  }
}

</mosaic_0001>

<llo_original>
// kernel: tpu_custom_call.1
$region0: #{tpu_custom_call.1}
  #allocation0 [shape = 'u32[]', space=smem, size = 0x4, offset = 0x4, fixed_abs, tag = 'smem constant byte address 0x4 - core index']
  #allocation1 [shape = 'u32[144,128]{1,0:T(1,128)}', space=vmem, size = 0x12000, scoped, tag = 'internal scratch']
  %s0 = inlined_call_operand.vmem [shape: f32[10,32], index: 0, kind: input, shape index: {}]
  %s1 = inlined_call_operand.vmem [shape: f32[10,2], index: 1, kind: input, shape index: {}]
  %s2 = inlined_call_operand.vmem [shape: f32[16,1], index: 2, kind: output, shape index: {}]
  %s3 = sld [smem:[#allocation0]]
  $region41: #{tpu_custom_call.1} parent=0
    _
  %s5 = ssub.s32 1, %s3
  %s6 = scalar_select 0, %s5, %s3
  loop: start=0, step=1, limit=4
  $region2: #{tpu_custom_call.1} parent=0 // loop_pre_header
    _
  $region3: #{tpu_custom_call.1} parent=0 // loop_header
    %s8 = sphi 0, %s12
    %p9 = scmp.ge.s32.totalorder %s8, 4
    %s18 = sphi 0, %s20
    %s21 = sphi 0, %s18
    %s22 = sphi 0, %s21
    %s38 = sphi 0, %s22
    %s44 = sphi 0, %s46
    %s47 = sphi 0, %s44
    %s48 = sphi 0, %s47
    %s64 = sphi 0, %s48
    %s70 = sphi 0, %s72
    %s73 = sphi 0, %s70
    %s74 = sphi 0, %s73
    %s90 = sphi 0, %s74
  $region4: #{tpu_custom_call.1} parent=0 // loop_header_branch
    %11 = sbr.rel (%p9) target = $region8
  $region5: #{tpu_custom_call.1} parent=0 // loop_body
    %s13 = ssub.s32 %s8, 1
    %s14 = ssub.s32 %s8, 2
    %s15 = sadd.s32 %s8, 1
    %s16 = ssub.s32 %s8, %s15
    %p17 = scmp.eq.s32.totalorder %s16, 0
    %s19 = sadd.s32 %s18, 1
    %s20 = scalar_select %p17, %s18, %s19
    %p23 = pneg %p17
    %p24 = scmp.eq.s32.totalorder %s8, 1
    %p25 = por %p23, %p24
    %p26 = scmp.ne.s32.totalorder %s18, %s21
    %p27 = scmp.eq.s32.totalorder %s8, 0
    %p28 = por %p26, %p27
    %p29 = scmp.ne.s32.totalorder %s18, %s21
    %p30 = scmp.eq.s32.totalorder %s13, 1
    %p31 = por %p29, %p30
    %p32 = scmp.ne.s32.totalorder %s21, %s22
    %p33 = scmp.eq.s32.totalorder %s13, 0
    %p34 = por %p32, %p33
    %p35 = scmp.ne.s32.totalorder %s21, %s22
    %p36 = scmp.eq.s32.totalorder %s14, 1
    %p37 = por %p35, %p36
    %p39 = scmp.ne.s32.totalorder %s22, %s38
    %p40 = scmp.eq.s32.totalorder %s14, 0
    %p41 = por %p39, %p40
    %s42 = ssub.s32 %s8, %s15
    %p43 = scmp.eq.s32.totalorder %s42, 0
    %s45 = sadd.s32 %s44, 1
    %s46 = scalar_select %p43, %s44, %s45
    %p49 = pneg %p43
    %p50 = scmp.eq.s32.totalorder %s8, 1
    %p51 = por %p49, %p50
    %p52 = scmp.ne.s32.totalorder %s44, %s47
    %p53 = scmp.eq.s32.totalorder %s8, 0
    %p54 = por %p52, %p53
    %p55 = scmp.ne.s32.totalorder %s44, %s47
    %p56 = scmp.eq.s32.totalorder %s13, 1
    %p57 = por %p55, %p56
    %p58 = scmp.ne.s32.totalorder %s47, %s48
    %p59 = scmp.eq.s32.totalorder %s13, 0
    %p60 = por %p58, %p59
    %p61 = scmp.ne.s32.totalorder %s47, %s48
    %p62 = scmp.eq.s32.totalorder %s14, 1
    %p63 = por %p61, %p62
    %p65 = scmp.ne.s32.totalorder %s48, %s64
    %p66 = scmp.eq.s32.totalorder %s14, 0
    %p67 = por %p65, %p66
    %s68 = ssub.s32 %s8, %s15
    %p69 = scmp.eq.s32.totalorder %s68, 0
    %s71 = sadd.s32 %s70, 1
    %s72 = scalar_select %p69, %s70, %s71
    %p75 = pneg %p69
    %p76 = scmp.eq.s32.totalorder %s8, 1
    %p77 = por %p75, %p76
    %p78 = scmp.ne.s32.totalorder %s70, %s73
    %p79 = scmp.eq.s32.totalorder %s8, 0
    %p80 = por %p78, %p79
    %p81 = scmp.ne.s32.totalorder %s70, %s73
    %p82 = scmp.eq.s32.totalorder %s13, 1
    %p83 = por %p81, %p82
    %p84 = scmp.ne.s32.totalorder %s73, %s74
    %p85 = scmp.eq.s32.totalorder %s13, 0
    %p86 = por %p84, %p85
    %p87 = scmp.ne.s32.totalorder %s73, %s74
    %p88 = scmp.eq.s32.totalorder %s14, 1
    %p89 = por %p87, %p88
    %p91 = scmp.ne.s32.totalorder %s74, %s90
    %p92 = scmp.eq.s32.totalorder %s14, 0
    %p93 = por %p91, %p92
    %p94 = scmp.le.s32.totalorder 1, %s8
    %p95 = scmp.lt.s32.totalorder %s8, 3
    %p96 = pnand %p94, %p95
    %p97 = pneg %p96
    // Predicated region
    $region9: #{tpu_custom_call.1} parent=5 // pred_check
      _
    $region10: #{tpu_custom_call.1} parent=5 // pred_check_branch
      %99 = sbr.rel (%p96) target = $region12
    $region11: #{tpu_custom_call.1} parent=5 // pred_region
      %s100 = ssub.s32 %s8, 1
    $region12: #{tpu_custom_call.1} parent=5 // pred_fallthru
      _
    %p101 = scmp.lt.s32.totalorder %s8, 2
    // Predicated region
    $region13: #{tpu_custom_call.1} parent=5 // pred_check
      %p102 = pneg %p101
    $region14: #{tpu_custom_call.1} parent=5 // pred_check_branch
      %104 = sbr.rel (%p102) target = $region16
    $region15: #{tpu_custom_call.1} parent=5 // pred_region
      // Predicated region
      $region17: #{tpu_custom_call.1} parent=15 // pred_check
        %p105 = pneg %p28
      $region18: #{tpu_custom_call.1} parent=15 // pred_check_branch
        %107 = sbr.rel (%p105) target = $region20
      $region19: #{tpu_custom_call.1} parent=15 // pred_region
        %p108 = scmp.lt.s32.totalorder %s8, 1
        %s109 = scalar_select %p108, %s8, 1
        %s110 = smul.addr %s109, 8
        %s111 = scalar_lea.vmem %s0, %s110
      $region20: #{tpu_custom_call.1} parent=15 // pred_fallthru
        _
      // Predicated region
      $region21: #{tpu_custom_call.1} parent=15 // pred_check
        %p112 = pneg %p54
      $region22: #{tpu_custom_call.1} parent=15 // pred_check_branch
        %114 = sbr.rel (%p112) target = $region24
      $region23: #{tpu_custom_call.1} parent=15 // pred_region
        %p115 = scmp.lt.s32.totalorder %s8, 1
        %s116 = scalar_select %p115, %s8, 1
        %s117 = smul.addr %s116, 8
        %s118 = scalar_lea.vmem %s1, %s117
      $region24: #{tpu_custom_call.1} parent=15 // pred_fallthru
        _
    $region16: #{tpu_custom_call.1} parent=5 // pred_fallthru
      _
    %p119 = scmp.le.s32.totalorder 1, %s8
    %p120 = scmp.lt.s32.totalorder %s8, 3
    %p121 = pnand %p119, %p120
    %p122 = pneg %p121
    // Predicated region
    $region25: #{tpu_custom_call.1} parent=5 // pred_check
      _
    $region26: #{tpu_custom_call.1} parent=5 // pred_check_branch
      %124 = sbr.rel (%p121) target = $region28
    $region27: #{tpu_custom_call.1} parent=5 // pred_region
      %s125 = ssub.s32 %s8, 1
      %p126 = scmp.lt.s32.totalorder %s13, 1
      %s127 = scalar_select %p126, %s13, 1
      %s128 = smul.addr %s127, 8
      %s129 = scalar_lea.vmem %s0, %s128
      %p130 = pneg %p34
      %p131 = pneg %p31
      %p132 = scmp.lt.s32.totalorder %s13, 1
      %s133 = scalar_select %p132, %s13, 1
      %s134 = smul.addr %s133, 8
      %s135 = scalar_lea.vmem %s1, %s134
      %p136 = pneg %p60
      %p137 = pneg %p57
      %p138 = pneg %p86
      %p139 = pneg %p83
      %p140 = scmp.lt.s32.totalorder %s13, 1
      %s141 = scalar_select %p140, %s13, 1
      %s142 = smul.addr %s141, 8
      %s143 = scalar_lea.vmem %s2, %s142
      %p144 = scmp.lt.s32.totalorder %s13, 1
      %s145 = scalar_select %p144, %s13, 1
      %s146 = smul.addr %s145, 8
      %s147 = scalar_lea.vmem %s0, %s146
      %p148 = scmp.lt.s32.totalorder %s13, 1
      %s149 = scalar_select %p148, %s13, 1
      %s150 = smul.addr %s149, 8
      %s151 = scalar_lea.vmem %s1, %s150
      %p152 = scmp.lt.s32.totalorder %s13, 1
      %s153 = scalar_select %p152, %s13, 1
      %s154 = smul.addr %s153, 8
      %s155 = scalar_lea.vmem %s2, %s154
      %v156 = vld [vmem:[%s147] sm:$0xff]
      %v157 = vld [vmem:[%s151] sm:$0xff]
      %v158 = vsub.f32 %v157, -2.0
      %v159 = vmul.f32 %v158, 0.01
      %v160 = vmul.f32 %v159, 1.442695
      %v161 = vpow.pop %v160
      %vm162 = vcmask 261120
      %v163 = vsel %vm162, %v156, -inf
      %164 = vmax.xlane.f32.xlu0 %v163
      %v165 = vpop.xlane.xlu0 %164
      %v166 = vsub.f32 %v156, %v165
      %v167 = vmul.f32 %v166, 1.442695
      %v168 = vpow.pop %v167
      %v169 = vsel %vm162, %v168, 0.0
      %170 = vadd.xlane.f32.xlu0 %v169
      %v171 = vpop.xlane.xlu0 %170
      %v172 = vlog2.pop %v171
      %v173 = vmul.f32 %v172, 0.6931472
      %v174 = vcvt.f32.s32.to.zero.pseudo %v157
      %v175 = vlaneseq
      %v176 = vand.u32 %v175, 127
      %177 = vset.pattern.permute.xlu0 0
      %178 = vperm.xlu0 %177, %v174
      %v179 = vpop.permute.xlu0 %178
      %vm180 = vcmp.eq.s32.totalorder %v176, %v179
      %v181 = vsel %vm180, %v156, 0.0
      %v182 = vsel %vm162, %v181, 0.0
      %183 = vadd.xlane.f32.xlu0 %v182
      %v184 = vpop.xlane.xlu0 %183
      %v185 = vadd.f32 %v165, %v173
      %v186 = vsub.f32 %v185, %v184
      %v187 = vmul.f32 %v161, %v186
      %vm188 = vcmp.ge.s32.totalorder %v174, 0
      %vm189 = vcmp.lt.s32.totalorder %v174, 32
      %vm190 = vmand %vm188, %vm189
      %s191 = smul.u32 %s13, 8
      %v192 = vlaneseq
      %v193 = vshrl.u32 %v192, 7
      %v194 = vstv %s191
      %v195 = vadd.s32 %v194, %v193
      %vm196 = vcmp.lt.s32.totalorder %v195, 10
      %vm197 = vmand %vm190, %vm196
      %199 = vrot.lane.b32.xlu0 %v187, 127
      %v200 = vpop.permute.xlu0 %199
      %v202 = vsel %vm197, %v200, 0.0
      %vm203 = vcmask 7168
      %204 = vst.msk [vmem:[%s155] sm:$0xff] %vm203, %v202
      %p205 = scmp.lt.s32.totalorder %s13, 1
      %s206 = scalar_select %p205, %s13, 1
      %s207 = smul.addr %s206, 8
      %s208 = scalar_lea.vmem %s2, %s207
      // Predicated region
      $region29: #{tpu_custom_call.1} parent=27 // pred_check
        %p209 = pneg %p83
      $region30: #{tpu_custom_call.1} parent=27 // pred_check_branch
        %211 = sbr.rel (%p209) target = $region32
      $region31: #{tpu_custom_call.1} parent=27 // pred_region
        _
      $region32: #{tpu_custom_call.1} parent=27 // pred_fallthru
        _
    $region28: #{tpu_custom_call.1} parent=5 // pred_fallthru
      _
    %p212 = scmp.le.s32.totalorder 2, %s8
    // Predicated region
    $region33: #{tpu_custom_call.1} parent=5 // pred_check
      %p213 = pneg %p212
    $region34: #{tpu_custom_call.1} parent=5 // pred_check_branch
      %215 = sbr.rel (%p213) target = $region36
    $region35: #{tpu_custom_call.1} parent=5 // pred_region
      %s216 = ssub.s32 %s8, 2
      // Predicated region
      $region37: #{tpu_custom_call.1} parent=35 // pred_check
        %p217 = pneg %p89
      $region38: #{tpu_custom_call.1} parent=35 // pred_check_branch
        %219 = sbr.rel (%p217) target = $region40
      $region39: #{tpu_custom_call.1} parent=35 // pred_region
        %p220 = scmp.lt.s32.totalorder %s14, 1
        %s221 = scalar_select %p220, %s14, 1
        %s222 = smul.addr %s221, 8
        %s223 = scalar_lea.vmem %s2, %s222
      $region40: #{tpu_custom_call.1} parent=35 // pred_fallthru
        _
    $region36: #{tpu_custom_call.1} parent=5 // pred_fallthru
      _
  $region6: #{tpu_custom_call.1} parent=0 // loop_footer
    %s12 = sadd.s32 1, %s8
  $region7: #{tpu_custom_call.1} parent=0 // loop_footer_branch
    %7 = sbr.rel target = $region3
  $region8: #{tpu_custom_call.1} parent=0 // loop_exit
    _

</llo_original>
